<compile_context>
chip_gen: v5e
topology: v5e:2x2
jax: 0.10.0
libtpu: 0.0.40
codegen_flags: <defaults>
</compile_context>

<pallas_src>
import functools

import numpy as np

import jax
import jax.numpy as jnp
from jax.experimental import pallas as pl
from jax.experimental.pallas import tpu as pltpu


def _pair(v):
    return (v, v) if isinstance(v, int) else tuple(v)


def _pool_matrix_np(in_size, out_size, k, stride, pad, dilation):
    """0/1 matrix P (out_size, in_size) over the UNPADDED axis.

    Zero-padded taps are skipped (they contribute 0 and the divisor is fixed at
    kH*kW), which is bit-identical to padding the tensor with zeros.
    """
    P = np.zeros((out_size, in_size), dtype=np.float32)
    for o in range(out_size):
        base = o * stride - pad
        for m in range(k):
            idx = base + m * dilation
            if 0 <= idx < in_size:
                P[o, idx] += 1.0
    return P


def _dilated_avgpool_kernel(x_ref, p_ref, o_ref, *, inv_area):
    # x_ref: (TB, H*W)           TB planes, lane-dense on H*W
    # p_ref: (H*W, H_out*W_out)  constant pooling matrix (already transposed)
    # o_ref: (TB, H_out*W_out)
    acc = jnp.dot(x_ref[...], p_ref[...], preferred_element_type=jnp.float32)
    o_ref[...] = (acc * inv_area).astype(o_ref.dtype)


def dilated_avg_pool2d(x, kernel_size, stride=None, padding=0, dilation=1):
    """x: (N, C, H, W) float array. Returns (N, C, H_out, W_out)."""
    kH, kW = _pair(kernel_size)
    stride = kernel_size if stride in (None, 0) else stride
    sH, sW = _pair(stride)
    pH, pW = _pair(padding)
    dH, dW = _pair(dilation)

    N, C, H, W = x.shape
    H_out = (H + 2 * pH - dH * (kH - 1) - 1) // sH + 1
    W_out = (W + 2 * pW - dW * (kW - 1) - 1) // sW + 1
    HW, HWo = H * W, H_out * W_out
    NC = N * C

    # Constant pooling matrix (compile-time numpy): Kronecker of the separable
    # row/col matrices, passed pre-transposed so the kernel needs no .T.
    ph = _pool_matrix_np(H, H_out, kH, sH, pH, dH)       # (H_out, H)
    pw = _pool_matrix_np(W, W_out, kW, sW, pW, dW)       # (W_out, W)
    p_t_np = np.kron(ph, pw).T                           # (H*W, H_out*W_out)

    # 0/1 entries are exact in any float dtype; match x's dtype for bf16/f16 to
    # halve DMA bytes, accumulate in f32 via preferred_element_type.
    if x.dtype == jnp.bfloat16 or x.dtype == jnp.float16:
        p_dtype = x.dtype
    else:
        p_dtype = jnp.float32
    p_t = jnp.asarray(p_t_np, dtype=p_dtype)

    # NCHW -> (N*C, H*W) is a free contiguous reshape: no pad, no transpose pass.
    x_flat = x.reshape(NC, HW)

    # Planes per grid step: as many as a conservative VMEM budget allows so each
    # DMA is MB-scale and the serial grid stays short (but >=2 steps when big
    # enough, so megacore parts get work).
    itemsize = jnp.dtype(x.dtype).itemsize
    in_budget = 8 * 1024 * 1024                          # input double-buffer budget
    tb_cap = max(8, in_budget // (2 * HW * itemsize))
    TB = int(min(NC, tb_cap, 1024))
    if TB < NC:
        TB = max(8, (TB // 8) * 8)                       # sublane-aligned partial block
    grid = (pl.cdiv(NC, TB),)

    o_itemsize = jnp.dtype(x.dtype).itemsize
    vmem_bytes = (2 * TB * HW * itemsize                 # input double buffer
                  + 2 * TB * HWo * o_itemsize            # output double buffer
                  + HW * HWo * jnp.dtype(p_dtype).itemsize)
    vmem_limit = int(min(max(2 * vmem_bytes, 32 * 1024 * 1024), 100 * 1024 * 1024))

    kernel = functools.partial(_dilated_avgpool_kernel, inv_area=1.0 / (kH * kW))

    out_flat = pl.pallas_call(
        kernel,
        out_shape=jax.ShapeDtypeStruct((NC, HWo), x.dtype),
        grid_spec=pltpu.PrefetchScalarGridSpec(
            num_scalar_prefetch=0,
            grid=grid,
            in_specs=[
                pl.BlockSpec((TB, HW), lambda i: (i, 0)),
                pl.BlockSpec((HW, HWo), lambda i: (0, 0)),   # constant block: fetched once
            ],
            out_specs=pl.BlockSpec((TB, HWo), lambda i: (i, 0)),
        ),
        compiler_params=pltpu.CompilerParams(
            dimension_semantics=("parallel",),
            vmem_limit_bytes=vmem_limit,
        ),
    )(x_flat, p_t)

    return out_flat.reshape(N, C, H_out, W_out)


def _reference(x, kernel_size, stride, padding, dilation):
    kH, kW = _pair(kernel_size)
    sH, sW = _pair(stride)
    pH, pW = _pair(padding)
    dH, dW = _pair(dilation)
    summed = jax.lax.reduce_window(
        x,
        0.0,
        jax.lax.add,
        window_dimensions=(1, 1, kH, kW),
        window_strides=(1, 1, sH, sW),
        padding=((0, 0), (0, 0), (pH, pH), (pW, pW)),
        window_dilation=(1, 1, dH, dW),
    )
    return summed / (kH * kW)


if __name__ == "__main__":
    # Module config matching the docstring example: size=3, stride=2, dilation=2
    # (plus padding=1 to exercise the zero-pad path). No learnable parameters.
    kernel_size, stride, padding, dilation = 3, 2, 1, 2

    key = jax.random.PRNGKey(0)
    x = jax.random.normal(key, (2, 4, 16, 16), dtype=jnp.float32)

    out = dilated_avg_pool2d(x, kernel_size, stride, padding, dilation)
    out = jax.block_until_ready(out)

    ref = _reference(x, kernel_size, stride, padding, dilation)
    assert out.shape == ref.shape, (out.shape, ref.shape)
    assert jnp.allclose(out, ref, atol=1e-5, rtol=1e-5), "mismatch vs reference"

    print("KERNEL_OK")
</pallas_src>

<mosaic_0001>
module attributes {stable_mosaic.version = 11 : i64} {
  func.func @_dilated_avgpool_kernel(%arg0: i32, %arg1: memref<8x256xf32, #tpu.memory_space<vmem>>, %arg2: memref<256x49xf32, #tpu.memory_space<vmem>>, %arg3: memref<8x49xf32, #tpu.memory_space<vmem>>) attributes {dimension_semantics = [#tpu.dimension_semantics<parallel>], iteration_bounds = array<i64: 1>, scalar_prefetch = 0 : i64, scratch_operands = 0 : i64, tpu.core_type = #tpu.core_type<tc>, window_params = [{transform_indices = @transform_0, window_bounds = array<i64: 8, 256>}, {pipeline_mode = #tpu.pipeline_mode<synchronous>, transform_indices = @transform_1, window_bounds = array<i64: 256, 49>}, {transform_indices = @transform_2, window_bounds = array<i64: 8, 49>}]} {
    %c0 = arith.constant 0 : index
    %c0_0 = arith.constant 0 : index
    %0 = vector.load %arg1[%c0, %c0_0] : memref<8x256xf32, #tpu.memory_space<vmem>>, vector<8x256xf32>
    %c0_1 = arith.constant 0 : index
    %c0_2 = arith.constant 0 : index
    %1 = vector.load %arg2[%c0_1, %c0_2] : memref<256x49xf32, #tpu.memory_space<vmem>>, vector<256x49xf32>
    %cst = arith.constant dense<0.000000e+00> : vector<8x49xf32>
    %2 = tpu.matmul %0, %1, %cst {dimension_numbers = #tpu.dot_dimension_numbers<[1], [0], [0], [1], [0, 0, 1, 1], [], []>} : vector<8x256xf32>, vector<256x49xf32>, vector<8x49xf32> -> vector<8x49xf32>
    %cst_3 = arith.constant 0.111111112 : f32
    %3 = vector.broadcast %cst_3 : f32 to vector<8x49xf32>
    %4 = arith.mulf %2, %3 : vector<8x49xf32>
    %c0_4 = arith.constant 0 : index
    %c0_5 = arith.constant 0 : index
    %5 = vector.load %arg3[%c0_4, %c0_5] : memref<8x49xf32, #tpu.memory_space<vmem>>, vector<8x49xf32>
    tpu.vector_store %arg3[%c0_4, %c0_5], %4 {strides = array<i32>} : memref<8x49xf32, #tpu.memory_space<vmem>>, vector<8x49xf32>,
    return
  }
  func.func @transform_0(%arg0: i32) -> (i32, i32) {
    %c0_i32 = arith.constant 0 : i32
    %c0_i32_0 = arith.constant 0 : i32
    return %arg0, %c0_i32 : i32, i32
  }
  func.func @transform_1(%arg0: i32) -> (i32, i32) {
    %c0_i32 = arith.constant 0 : i32
    %c0_i32_0 = arith.constant 0 : i32
    %c0_i32_1 = arith.constant 0 : i32
    return %c0_i32, %c0_i32_0 : i32, i32
  }
  func.func @transform_2(%arg0: i32) -> (i32, i32) {
    %c0_i32 = arith.constant 0 : i32
    %c0_i32_0 = arith.constant 0 : i32
    return %arg0, %c0_i32 : i32, i32
  }
}

</mosaic_0001>

<llo_original>
// kernel: tpu_custom_call.1
$region0: #{tpu_custom_call.1}
  #allocation0 [shape = 'u32[]', space=smem, size = 0x4, offset = 0x4, fixed_abs, tag = 'smem constant byte address 0x4 - core index']
  #allocation1 [shape = 'u32[72,128]{1,0:T(1,128)}', space=vmem, size = 0x9000, scoped, tag = 'internal scratch']
  %s0 = inlined_call_operand.vmem [shape: f32[8,256], index: 0, kind: input, shape index: {}]
  %s1 = inlined_call_operand.vmem [shape: f32[256,49], index: 1, kind: input, shape index: {}]
  %s2 = inlined_call_operand.hbm [shape: f32[8,49], index: 2, kind: output, shape index: {}]
  %s3 = sld [smem:[#allocation0]]
  $region18: #{tpu_custom_call.1} parent=0
    _
  %s5 = ssub.s32 1, %s3
  %s6 = scalar_select 0, %s5, %s3
  $region1: #{tpu_custom_call.1} parent=0
    #allocation2 [shape = 'u8[4096]{0}', space=vmem, size = 0x1000, scoped, tag = 'output window, operand 0, single buffered']
    #allocation3 [shape = 's32[1]{0}', space=sflag, size = 0x4, scoped, tag = 'scoped memory for tpu_custom_call.1']
    %7 = vsyncpa [#allocation3], 0
    // Predicated region
    $region2: #{tpu_custom_call.1} parent=1 // pred_check
      _
    $region3: #{tpu_custom_call.1} parent=1 // pred_check_branch
      %9 = sbr.rel (0) target = $region5
    $region4: #{tpu_custom_call.1} parent=1 // pred_region
      _
    $region5: #{tpu_custom_call.1} parent=1 // pred_fallthru
      _
    // Predicated region
    $region6: #{tpu_custom_call.1} parent=1 // pred_check
      _
    $region7: #{tpu_custom_call.1} parent=1 // pred_check_branch
      %11 = sbr.rel (0) target = $region9
    $region8: #{tpu_custom_call.1} parent=1 // pred_region
      _
    $region9: #{tpu_custom_call.1} parent=1 // pred_fallthru
      _
    %v12 = vld [vmem:[%s0] sm:$0xff]
    %v13 = vld [vmem:[%s0 + $0x8] sm:$0xff]
    %v14 = vld [vmem:[%s1] sm:$0xff]
    %v15 = vld [vmem:[%s1 + $0x8] sm:$0xff]
    %v16 = vld [vmem:[%s1 + $0x10] sm:$0xff]
    %v17 = vld [vmem:[%s1 + $0x18] sm:$0xff]
    %v18 = vld [vmem:[%s1 + $0x20] sm:$0xff]
    %v19 = vld [vmem:[%s1 + $0x28] sm:$0xff]
    %v20 = vld [vmem:[%s1 + $0x30] sm:$0xff]
    %v21 = vld [vmem:[%s1 + $0x38] sm:$0xff]
    %v22 = vld [vmem:[%s1 + $0x40] sm:$0xff]
    %v23 = vld [vmem:[%s1 + $0x48] sm:$0xff]
    %v24 = vld [vmem:[%s1 + $0x50] sm:$0xff]
    %v25 = vld [vmem:[%s1 + $0x58] sm:$0xff]
    %v26 = vld [vmem:[%s1 + $0x60] sm:$0xff]
    %v27 = vld [vmem:[%s1 + $0x68] sm:$0xff]
    %v28 = vld [vmem:[%s1 + $0x70] sm:$0xff]
    %v29 = vld [vmem:[%s1 + $0x78] sm:$0xff]
    %v30 = vld [vmem:[%s1 + $0x80] sm:$0xff]
    %v31 = vld [vmem:[%s1 + $0x88] sm:$0xff]
    %v32 = vld [vmem:[%s1 + $0x90] sm:$0xff]
    %v33 = vld [vmem:[%s1 + $0x98] sm:$0xff]
    %v34 = vld [vmem:[%s1 + $0xa0] sm:$0xff]
    %v35 = vld [vmem:[%s1 + $0xa8] sm:$0xff]
    %v36 = vld [vmem:[%s1 + $0xb0] sm:$0xff]
    %v37 = vld [vmem:[%s1 + $0xb8] sm:$0xff]
    %v38 = vld [vmem:[%s1 + $0xc0] sm:$0xff]
    %v39 = vld [vmem:[%s1 + $0xc8] sm:$0xff]
    %v40 = vld [vmem:[%s1 + $0xd0] sm:$0xff]
    %v41 = vld [vmem:[%s1 + $0xd8] sm:$0xff]
    %v42 = vld [vmem:[%s1 + $0xe0] sm:$0xff]
    %v43 = vld [vmem:[%s1 + $0xe8] sm:$0xff]
    %v44 = vld [vmem:[%s1 + $0xf0] sm:$0xff]
    %v45 = vld [vmem:[%s1 + $0xf8] sm:$0xff]
    %46 = vmatpush.msra.mxu0 %v29
    %47 = vmatpush.msra.mxu0 %v28
    %48 = vmatpush.msra.mxu0 %v27
    %49 = vmatpush.msra.mxu0 %v26
    %50 = vmatpush.msra.mxu0 %v25
    %51 = vmatpush.msra.mxu0 %v24
    %52 = vmatpush.msra.mxu0 %v23
    %53 = vmatpush.msra.mxu0 %v22
    %54 = vmatpush.msra.mxu0 %v21
    %55 = vmatpush.msra.mxu0 %v20
    %56 = vmatpush.msra.mxu0 %v19
    %57 = vmatpush.msra.mxu0 %v18
    %58 = vmatpush.msra.mxu0 %v17
    %59 = vmatpush.msra.mxu0 %v16
    %60 = vmatpush.msra.mxu0 %v15
    %61 = vmatpush.msra.mxu0 %v14
    %62 = vmatmul.f32.gmra.mxu0 %v12
    %v63 = vpop.f32.mrf.mxu0
    %v64 = vadd.f32 0.0, %v63
    %65 = vdwg.mxu0
    %66 = vmatpush.msra.mxu0 %v45
    %67 = vmatpush.msra.mxu0 %v44
    %68 = vmatpush.msra.mxu0 %v43
    %69 = vmatpush.msra.mxu0 %v42
    %70 = vmatpush.msra.mxu0 %v41
    %71 = vmatpush.msra.mxu0 %v40
    %72 = vmatpush.msra.mxu0 %v39
    %73 = vmatpush.msra.mxu0 %v38
    %74 = vmatpush.msra.mxu0 %v37
    %75 = vmatpush.msra.mxu0 %v36
    %76 = vmatpush.msra.mxu0 %v35
    %77 = vmatpush.msra.mxu0 %v34
    %78 = vmatpush.msra.mxu0 %v33
    %79 = vmatpush.msra.mxu0 %v32
    %80 = vmatpush.msra.mxu0 %v31
    %81 = vmatpush.msra.mxu0 %v30
    %82 = vmatmul.f32.gmra.mxu0 %v13
    %v83 = vpop.f32.mrf.mxu0
    %v84 = vadd.f32 %v64, %v83
    %85 = vdwg.mxu0
    %v86 = vmul.f32 %v84, 0.11111111
    %vm87 = vcmask 400384
    %88 = vst.msk [vmem:[#allocation2] sm:$0xff] %vm87, %v86
    // Predicated region
    $region10: #{tpu_custom_call.1} parent=1 // pred_check
      _
    $region11: #{tpu_custom_call.1} parent=1 // pred_check_branch
      %90 = sbr.rel (0) target = $region13
    $region12: #{tpu_custom_call.1} parent=1 // pred_region
      %92 = vsyncadd [#allocation3], 0
      %s94 = sshll.u32 [#allocation2], 4
      %s95 = int_to_ptr.vmem [resolvable:$true] %s94
      %s96 = sshll.u32 %s2, 4
      %s97 = int_to_ptr.hbm [resolvable:$true] %s96
      %99 = dma.vmem_to_hbm [thread:$0]  %s95, 128, %s97, [#allocation3]
    $region13: #{tpu_custom_call.1} parent=1 // pred_fallthru
      _
    // Predicated region
    $region14: #{tpu_custom_call.1} parent=1 // pred_check
      _
    $region15: #{tpu_custom_call.1} parent=1 // pred_check_branch
      %101 = sbr.rel (0) target = $region17
    $region16: #{tpu_custom_call.1} parent=1 // pred_region
      %103 = dma.done [#allocation3], 128
    $region17: #{tpu_custom_call.1} parent=1 // pred_fallthru
      _
    %104 = vsyncpa [#allocation3], 1

</llo_original>
